<compile_context>
chip_gen: v7x
topology: tpu7x:2x2x1
jax: 0.10.0
libtpu: 0.0.40
codegen_flags: <defaults>
</compile_context>

<pallas_src>
import jax
import jax.numpy as jnp
from jax.experimental import pallas as pl
from jax.experimental.pallas import tpu as pltpu

GOAL_SIZE = 4                        # assumed Goal.size()
STATE_DIM = GOAL_SIZE - 1            # 3
REWARD_BINS = 5
REWARD_EMBED = 32
STATE_EMBED = 96
HIDDEN = REWARD_EMBED + STATE_EMBED  # 128
EMBED_DIM = 64
FEAT = STATE_DIM + REWARD_BINS       # 8 packed features per logical row

DEFAULT_BLOCK_B = 2048               # logical batch rows per tile (~2 MiB VMEM/tile)


def _cdiv(a, b):
    return (a + b - 1) // b


def _round_up(x, m):
    return _cdiv(x, m) * m


def _goal_reward_kernel(x_ref, wh_ref, bh_ref, w2_ref, b2_ref, out_ref):
    """One batch tile; two logical batch rows per physical row.

    x_ref  : (tbh, 16) f32 -- row i packs logical rows 2i and 2i+1:
             lanes [0:3]/[8:11]  = states, lanes [3:8]/[11:16] = cum (replicated)
    wh_ref : (16, 256) bf16 -- block-diag of [W1 | 0 ; 0 | Wr]
    bh_ref : (1, 256)  f32  -- [b1, br, b1, br]
    w2_ref : (256, 128) bf16-- block-diag of W2
    b2_ref : (1, 128)  f32  -- [b2, b2]
    out_ref: (tbh, 128) f32 -- row i = [out(2i), out(2i+1)]  (lane-dense store)
    """
    x = x_ref[...]                                               # (tbh, 16)

    # Build [states(3), one_hot(5)] x 2 in-vregs: one iota, one compare, one select.
    lane = jax.lax.broadcasted_iota(jnp.int32, x.shape, 1)       # 0..15
    m = jnp.where(lane < FEAT, lane, lane - FEAT)                # per-pair feature idx
    one_hot = (x == (m - STATE_DIM).astype(jnp.float32)).astype(jnp.float32)
    feat = jnp.where(m < STATE_DIM, x, one_hot)                  # (tbh, 16)

    # Both layers on the MXU: bf16 inputs, f32 accumulation (precision policy).
    hidden = jnp.maximum(
        jnp.dot(feat.astype(jnp.bfloat16), wh_ref[...],
                preferred_element_type=jnp.float32) + bh_ref[...], 0.0)   # (tbh, 256)
    out = jnp.dot(hidden.astype(jnp.bfloat16), w2_ref[...],
                  preferred_element_type=jnp.float32) + b2_ref[...]       # (tbh, 128)
    out_ref[...] = jnp.maximum(out, 0.0).astype(out_ref.dtype)


def goal_reward_embedder(states, cum_rewards, params, *, block_b=DEFAULT_BLOCK_B):
    """Pallas forward pass.

    Args:
      states:      (B, STATE_DIM) float32  -- goal.all_but_cum_reward
      cum_rewards: (B,) int32              -- goal.cum_reward in [0, 5)
      params:      dict with w1 (3,96), b1 (1,96), wr (5,32), br (1,32),
                   w2 (128,64), b2 (1,64)  (stored (in, out): y = x @ W + b)
    Returns:
      (B, EMBED_DIM) float32
    """
    B = states.shape[0]

    # One packed input stream: [s0, s1, s2, cum, cum, cum, cum, cum] per row.
    cum_f = cum_rewards.reshape(B, 1).astype(jnp.float32)
    packed = jnp.concatenate(
        [states.astype(jnp.float32),
         jnp.broadcast_to(cum_f, (B, REWARD_BINS))], axis=1)            # (B, 8)

    # Layer-1 weights with the concat folded in: hidden = [states|one_hot] @ Wh + bh.
    wh = jnp.zeros((FEAT, HIDDEN), jnp.float32)
    wh = wh.at[:STATE_DIM, :STATE_EMBED].set(params["w1"].astype(jnp.float32))
    wh = wh.at[STATE_DIM:, STATE_EMBED:].set(params["wr"].astype(jnp.float32))
    bh = jnp.concatenate([params["b1"], params["br"]], axis=1)          # (1, 128)
    w2 = params["w2"].astype(jnp.float32)                               # (128, 64)
    b2 = params["b2"].astype(jnp.float32)                               # (1, 64)

    # Row-pair (lane-dense output) duplication: block-diagonal weights.
    def _bdiag(a):
        z = jnp.zeros_like(a)
        return jnp.concatenate(
            [jnp.concatenate([a, z], axis=1),
             jnp.concatenate([z, a], axis=1)], axis=0)

    wh2 = _bdiag(wh).astype(jnp.bfloat16)                               # (16, 256)
    bh2 = jnp.concatenate([bh, bh], axis=1)                             # (1, 256)
    w2d = _bdiag(w2).astype(jnp.bfloat16)                               # (256, 128)
    b2d = jnp.concatenate([b2, b2], axis=1)                             # (1, 128)

    # Tile sizing: balanced tiles to minimize padding; >=2 tiles when the batch
    # allows (megacore / v7x 2-TC sharding); logical tile a multiple of 16 so
    # the paired tile (tb//2 rows) is a whole number of 8-row sublanes.
    n_tiles = max(_cdiv(B, block_b), 1)
    if n_tiles == 1 and B > 16:
        n_tiles = 2
    tb = min(_round_up(_cdiv(B, n_tiles), 16), _round_up(block_b, 16))
    n_tiles = _cdiv(B, tb)
    padded_b = n_tiles * tb
    if padded_b != B:
        packed = jnp.pad(packed, ((0, padded_b - B), (0, 0)))
    packed2 = packed.reshape(padded_b // 2, 2 * FEAT)                   # free reshape
    tbh = tb // 2

    out2 = pl.pallas_call(
        _goal_reward_kernel,
        out_shape=jax.ShapeDtypeStruct((padded_b // 2, 2 * EMBED_DIM), jnp.float32),
        grid=(n_tiles,),
        in_specs=[
            pl.BlockSpec((tbh, 2 * FEAT), lambda i: (i, 0)),    # batch-tiled stream
            pl.BlockSpec(wh2.shape, lambda i: (0, 0)),          # resident weights
            pl.BlockSpec(bh2.shape, lambda i: (0, 0)),
            pl.BlockSpec(w2d.shape, lambda i: (0, 0)),
            pl.BlockSpec(b2d.shape, lambda i: (0, 0)),
        ],
        out_specs=pl.BlockSpec((tbh, 2 * EMBED_DIM), lambda i: (i, 0)),
        compiler_params=pltpu.CompilerParams(
            dimension_semantics=("parallel",)),
    )(packed2, wh2, bh2, w2d, b2d)

    out = out2.reshape(padded_b, EMBED_DIM)                             # free reshape
    return out[:B]


def init_params(key):
    """Deterministic synthetic parameters (PyTorch nn.Linear shapes, stored
    transposed as (in, out) so the math is x @ W + b)."""
    ks = jax.random.split(key, 6)
    scale = 0.1
    return {
        "wr": scale * jax.random.normal(ks[0], (REWARD_BINS, REWARD_EMBED), jnp.float32),
        "br": scale * jax.random.normal(ks[1], (1, REWARD_EMBED), jnp.float32),
        "w1": scale * jax.random.normal(ks[2], (STATE_DIM, STATE_EMBED), jnp.float32),
        "b1": scale * jax.random.normal(ks[3], (1, STATE_EMBED), jnp.float32),
        "w2": scale * jax.random.normal(ks[4], (HIDDEN, EMBED_DIM), jnp.float32),
        "b2": scale * jax.random.normal(ks[5], (1, EMBED_DIM), jnp.float32),
    }


def reference(states, cum_rewards, params):
    """Pure-JAX f32 reference matching the PyTorch module."""
    one_hot = jax.nn.one_hot(cum_rewards, REWARD_BINS, dtype=jnp.float32)
    reward_embed = jax.nn.relu(one_hot @ params["wr"] + params["br"])
    state_embed = jax.nn.relu(states @ params["w1"] + params["b1"])
    hidden = jnp.concatenate([state_embed, reward_embed], axis=1)
    return jax.nn.relu(hidden @ params["w2"] + params["b2"])


if __name__ == "__main__":
    key = jax.random.PRNGKey(0)
    kp, ks, kr = jax.random.split(key, 3)

    params = init_params(kp)

    # Small demo batch (single tile, padded 8 -> 16 rows).
    B = 8
    states = jax.random.normal(ks, (B, STATE_DIM), jnp.float32)
    cum_rewards = jax.random.randint(kr, (B,), 0, REWARD_BINS, jnp.int32)

    out = jax.block_until_ready(goal_reward_embedder(states, cum_rewards, params))
    ref = reference(states, cum_rewards, params)
    assert out.shape == (B, EMBED_DIM)
    assert jnp.allclose(out, ref, atol=1e-2, rtol=1e-2), "mismatch vs reference (B=8)"

    # Exercise the multi-tile grid + batch-padding path with a small tile.
    B2 = 200
    ks2, kr2 = jax.random.split(jax.random.PRNGKey(1))
    states2 = jax.random.normal(ks2, (B2, STATE_DIM), jnp.float32)
    cum2 = jax.random.randint(kr2, (B2,), 0, REWARD_BINS, jnp.int32)
    out2 = jax.block_until_ready(
        goal_reward_embedder(states2, cum2, params, block_b=64))
    ref2 = reference(states2, cum2, params)
    assert out2.shape == (B2, EMBED_DIM)
    assert jnp.allclose(out2, ref2, atol=1e-2, rtol=1e-2), "mismatch vs reference (B=200)"

    print("KERNEL_OK")
</pallas_src>

<mosaic_0001>
module attributes {stable_mosaic.version = 11 : i64} {
  func.func @_goal_reward_kernel(%arg0: i32, %arg1: memref<8x16xf32, #tpu.memory_space<vmem>>, %arg2: memref<16x256xbf16, #tpu.memory_space<vmem>>, %arg3: memref<1x256xf32, #tpu.memory_space<vmem>>, %arg4: memref<256x128xbf16, #tpu.memory_space<vmem>>, %arg5: memref<1x128xf32, #tpu.memory_space<vmem>>, %arg6: memref<8x128xf32, #tpu.memory_space<vmem>>) attributes {dimension_semantics = [#tpu.dimension_semantics<parallel>], iteration_bounds = array<i64: 1>, scalar_prefetch = 0 : i64, scratch_operands = 0 : i64, tpu.core_type = #tpu.core_type<tc>, window_params = [{transform_indices = @transform_0, window_bounds = array<i64: 8, 16>}, {pipeline_mode = #tpu.pipeline_mode<synchronous>, transform_indices = @transform_1, window_bounds = array<i64: 16, 256>}, {pipeline_mode = #tpu.pipeline_mode<synchronous>, transform_indices = @transform_2, window_bounds = array<i64: 1, 256>}, {pipeline_mode = #tpu.pipeline_mode<synchronous>, transform_indices = @transform_3, window_bounds = array<i64: 256, 128>}, {pipeline_mode = #tpu.pipeline_mode<synchronous>, transform_indices = @transform_4, window_bounds = array<i64: 1, 128>}, {transform_indices = @transform_5, window_bounds = array<i64: 8, 128>}]} {
    %c0 = arith.constant 0 : index
    %c0_0 = arith.constant 0 : index
    %0 = vector.load %arg1[%c0, %c0_0] : memref<8x16xf32, #tpu.memory_space<vmem>>, vector<8x16xf32>
    %1 = tpu.iota {dimensions = array<i32: 1>} : vector<8x16xi32>
    %c8_i32 = arith.constant 8 : i32
    %2 = vector.broadcast %c8_i32 : i32 to vector<8x16xi32>
    %3 = arith.cmpi slt, %1, %2 : vector<8x16xi32>
    %c8_i32_1 = arith.constant 8 : i32
    %4 = vector.broadcast %c8_i32_1 : i32 to vector<8x16xi32>
    %5 = arith.subi %1, %4 : vector<8x16xi32>
    %6 = arith.select %3, %1, %5 : vector<8x16xi1>, vector<8x16xi32>
    %c3_i32 = arith.constant 3 : i32
    %7 = vector.broadcast %c3_i32 : i32 to vector<8x16xi32>
    %8 = arith.subi %6, %7 : vector<8x16xi32>
    %9 = arith.sitofp %8 : vector<8x16xi32> to vector<8x16xf32>
    %10 = arith.cmpf oeq, %0, %9 : vector<8x16xf32>
    %11 = arith.extui %10 : vector<8x16xi1> to vector<8x16xi32>
    %12 = arith.sitofp %11 : vector<8x16xi32> to vector<8x16xf32>
    %c3_i32_2 = arith.constant 3 : i32
    %13 = vector.broadcast %c3_i32_2 : i32 to vector<8x16xi32>
    %14 = arith.cmpi slt, %6, %13 : vector<8x16xi32>
    %15 = arith.select %14, %0, %12 : vector<8x16xi1>, vector<8x16xf32>
    %16 = arith.truncf %15 : vector<8x16xf32> to vector<8x16xbf16>
    %c0_3 = arith.constant 0 : index
    %c0_4 = arith.constant 0 : index
    %17 = vector.load %arg2[%c0_3, %c0_4] : memref<16x256xbf16, #tpu.memory_space<vmem>>, vector<16x256xbf16>
    %cst = arith.constant dense<0.000000e+00> : vector<8x256xf32>
    %18 = tpu.matmul %16, %17, %cst {dimension_numbers = #tpu.dot_dimension_numbers<[1], [0], [0], [1], [0, 0, 1, 1], [], []>} : vector<8x16xbf16>, vector<16x256xbf16>, vector<8x256xf32> -> vector<8x256xf32>
    %c0_5 = arith.constant 0 : index
    %c0_6 = arith.constant 0 : index
    %19 = vector.load %arg3[%c0_5, %c0_6] : memref<1x256xf32, #tpu.memory_space<vmem>>, vector<1x256xf32>
    %20 = vector.broadcast %19 : vector<1x256xf32> to vector<8x256xf32>
    %21 = arith.addf %18, %20 : vector<8x256xf32>
    %cst_7 = arith.constant 0.000000e+00 : f32
    %22 = vector.broadcast %cst_7 : f32 to vector<8x256xf32>
    %23 = arith.maximumf %21, %22 : vector<8x256xf32>
    %24 = arith.truncf %23 : vector<8x256xf32> to vector<8x256xbf16>
    %c0_8 = arith.constant 0 : index
    %c0_9 = arith.constant 0 : index
    %25 = vector.load %arg4[%c0_8, %c0_9] : memref<256x128xbf16, #tpu.memory_space<vmem>>, vector<256x128xbf16>
    %cst_10 = arith.constant dense<0.000000e+00> : vector<8x128xf32>
    %26 = tpu.matmul %24, %25, %cst_10 {dimension_numbers = #tpu.dot_dimension_numbers<[1], [0], [0], [1], [0, 0, 1, 1], [], []>} : vector<8x256xbf16>, vector<256x128xbf16>, vector<8x128xf32> -> vector<8x128xf32>
    %c0_11 = arith.constant 0 : index
    %c0_12 = arith.constant 0 : index
    %27 = vector.load %arg5[%c0_11, %c0_12] : memref<1x128xf32, #tpu.memory_space<vmem>>, vector<1x128xf32>
    %28 = vector.broadcast %27 : vector<1x128xf32> to vector<8x128xf32>
    %29 = arith.addf %26, %28 : vector<8x128xf32>
    %cst_13 = arith.constant 0.000000e+00 : f32
    %30 = vector.broadcast %cst_13 : f32 to vector<8x128xf32>
    %31 = arith.maximumf %29, %30 : vector<8x128xf32>
    %c0_14 = arith.constant 0 : index
    %c0_15 = arith.constant 0 : index
    %32 = vector.load %arg6[%c0_14, %c0_15] : memref<8x128xf32, #tpu.memory_space<vmem>>, vector<8x128xf32>
    tpu.vector_store %arg6[%c0_14, %c0_15], %31 {strides = array<i32>} : memref<8x128xf32, #tpu.memory_space<vmem>>, vector<8x128xf32>,
    return
  }
  func.func @transform_0(%arg0: i32) -> (i32, i32) {
    %c0_i32 = arith.constant 0 : i32
    %c0_i32_0 = arith.constant 0 : i32
    return %arg0, %c0_i32 : i32, i32
  }
  func.func @transform_1(%arg0: i32) -> (i32, i32) {
    %c0_i32 = arith.constant 0 : i32
    %c0_i32_0 = arith.constant 0 : i32
    %c0_i32_1 = arith.constant 0 : i32
    return %c0_i32, %c0_i32_0 : i32, i32
  }
  func.func @transform_2(%arg0: i32) -> (i32, i32) {
    %c0_i32 = arith.constant 0 : i32
    %c0_i32_0 = arith.constant 0 : i32
    %c0_i32_1 = arith.constant 0 : i32
    return %c0_i32, %c0_i32_0 : i32, i32
  }
  func.func @transform_3(%arg0: i32) -> (i32, i32) {
    %c0_i32 = arith.constant 0 : i32
    %c0_i32_0 = arith.constant 0 : i32
    %c0_i32_1 = arith.constant 0 : i32
    return %c0_i32, %c0_i32_0 : i32, i32
  }
  func.func @transform_4(%arg0: i32) -> (i32, i32) {
    %c0_i32 = arith.constant 0 : i32
    %c0_i32_0 = arith.constant 0 : i32
    %c0_i32_1 = arith.constant 0 : i32
    return %c0_i32, %c0_i32_0 : i32, i32
  }
  func.func @transform_5(%arg0: i32) -> (i32, i32) {
    %c0_i32 = arith.constant 0 : i32
    %c0_i32_0 = arith.constant 0 : i32
    return %arg0, %c0_i32 : i32, i32
  }
}

</mosaic_0001>

<llo_original>
// kernel: tpu_custom_call.1
$region0: #{tpu_custom_call.1}
  #allocation0 [shape = 'u32[]', space=smem, size = 0x4, offset = 0x4, fixed_abs, tag = 'smem constant byte address 0x4 - core index']
  #allocation1 [shape = 'u32[144,128]{1,0:T(1,128)}', space=vmem, size = 0x12000, scoped, tag = 'internal scratch']
  %s0 = inlined_call_operand.hbm [shape: f32[8,16], index: 0, kind: input, shape index: {}]
  %s1 = inlined_call_operand.hbm [shape: bf16[16,256], index: 1, kind: input, shape index: {}]
  %s2 = inlined_call_operand.vmem [shape: f32[1,256], index: 2, kind: input, shape index: {}]
  %s3 = inlined_call_operand.hbm [shape: bf16[256,128], index: 3, kind: input, shape index: {}]
  %s4 = inlined_call_operand.vmem [shape: f32[1,128], index: 4, kind: input, shape index: {}]
  %s5 = inlined_call_operand.hbm [shape: f32[8,128], index: 5, kind: output, shape index: {}]
  %s6 = sld [smem:[#allocation0]]
  $region42: #{tpu_custom_call.1} parent=0
    _
  %s8 = ssub.s32 1, %s6
  %s9 = scalar_select 0, %s8, %s6
  $region1: #{tpu_custom_call.1} parent=0
    #allocation2 [shape = 'u8[4096]{0}', space=vmem, size = 0x1000, scoped, tag = 'input window, operand 0, single buffered']
    #allocation3 [shape = 's32[1]{0}', space=sflag, size = 0x4, scoped, tag = 'scoped memory for tpu_custom_call.1']
    #allocation4 [shape = 's32[1]{0}', space=sflag, size = 0x4, scoped, tag = 'scoped memory for tpu_custom_call.1']
    #allocation5 [shape = 'u8[8192]{0}', space=vmem, size = 0x2000, scoped, tag = 'input window, operand 1, single buffered']
    #allocation6 [shape = 's32[1]{0}', space=sflag, size = 0x4, scoped, tag = 'scoped memory for tpu_custom_call.1']
    #allocation7 [shape = 'u8[65536]{0}', space=vmem, size = 0x10000, scoped, tag = 'input window, operand 3, single buffered']
    #allocation8 [shape = 'u8[4096]{0}', space=vmem, size = 0x1000, scoped, tag = 'output window, operand 0, single buffered']
    %10 = vsyncpa [#allocation3], 0
    %11 = vsyncpa [#allocation6], 0
    %12 = vsyncpa [#allocation4], 0
    // Predicated region
    $region2: #{tpu_custom_call.1} parent=1 // pred_check
      _
    $region3: #{tpu_custom_call.1} parent=1 // pred_check_branch
      %14 = sbr.rel (0) target = $region5
    $region4: #{tpu_custom_call.1} parent=1 // pred_region
      %s16 = ssub.s32 128, 128
      %17 = vsyncadd [#allocation3], %s16
      %s19 = sshll.u32 [#allocation2], 4
      %s20 = int_to_ptr.vmem [resolvable:$true] %s19
      %22 = dma.hbm_to_vmem [thread:$0]  %s0, 128, %s20, [#allocation3]
    $region5: #{tpu_custom_call.1} parent=1 // pred_fallthru
      _
    // Predicated region
    $region6: #{tpu_custom_call.1} parent=1 // pred_check
      _
    $region7: #{tpu_custom_call.1} parent=1 // pred_check_branch
      %24 = sbr.rel (0) target = $region9
    $region8: #{tpu_custom_call.1} parent=1 // pred_region
      %s26 = ssub.s32 256, 256
      %27 = vsyncadd [#allocation6], %s26
      %s28 = sshll.u32 [#allocation5], 4
      %s29 = int_to_ptr.vmem [resolvable:$true] %s28
      %34 = dma.hbm_to_vmem [thread:$0]  %s1, 256, %s29, [#allocation6], 128, 128, 8
    $region9: #{tpu_custom_call.1} parent=1 // pred_fallthru
      _
    // Predicated region
    $region10: #{tpu_custom_call.1} parent=1 // pred_check
      _
    $region11: #{tpu_custom_call.1} parent=1 // pred_check_branch
      %36 = sbr.rel (0) target = $region13
    $region12: #{tpu_custom_call.1} parent=1 // pred_region
      _
    $region13: #{tpu_custom_call.1} parent=1 // pred_fallthru
      _
    // Predicated region
    $region14: #{tpu_custom_call.1} parent=1 // pred_check
      _
    $region15: #{tpu_custom_call.1} parent=1 // pred_check_branch
      %38 = sbr.rel (0) target = $region17
    $region16: #{tpu_custom_call.1} parent=1 // pred_region
      %s40 = ssub.s32 2048, 2048
      %41 = vsyncadd [#allocation6], %s40
      %s42 = sshll.u32 [#allocation7], 4
      %s43 = int_to_ptr.vmem [resolvable:$true] %s42
      %48 = dma.hbm_to_vmem [thread:$0]  %s3, 2048, %s43, [#allocation6], 64, 64, 4
    $region17: #{tpu_custom_call.1} parent=1 // pred_fallthru
      _
    // Predicated region
    $region18: #{tpu_custom_call.1} parent=1 // pred_check
      _
    $region19: #{tpu_custom_call.1} parent=1 // pred_check_branch
      %50 = sbr.rel (0) target = $region21
    $region20: #{tpu_custom_call.1} parent=1 // pred_region
      _
    $region21: #{tpu_custom_call.1} parent=1 // pred_fallthru
      _
    // Predicated region
    $region22: #{tpu_custom_call.1} parent=1 // pred_check
      _
    $region23: #{tpu_custom_call.1} parent=1 // pred_check_branch
      %52 = sbr.rel (0) target = $region25
    $region24: #{tpu_custom_call.1} parent=1 // pred_region
      %53 = dma.done [#allocation3], 128
    $region25: #{tpu_custom_call.1} parent=1 // pred_fallthru
      _
    // Predicated region
    $region26: #{tpu_custom_call.1} parent=1 // pred_check
      _
    $region27: #{tpu_custom_call.1} parent=1 // pred_check_branch
      %55 = sbr.rel (0) target = $region29
    $region28: #{tpu_custom_call.1} parent=1 // pred_region
      %56 = dma.done [#allocation6], 256
    $region29: #{tpu_custom_call.1} parent=1 // pred_fallthru
      _
    // Predicated region
    $region30: #{tpu_custom_call.1} parent=1 // pred_check
      _
    $region31: #{tpu_custom_call.1} parent=1 // pred_check_branch
      %58 = sbr.rel (0) target = $region33
    $region32: #{tpu_custom_call.1} parent=1 // pred_region
      %59 = dma.done [#allocation6], 2048
    $region33: #{tpu_custom_call.1} parent=1 // pred_fallthru
      _
    %v61 = vld [vmem:[#allocation2] sm:$0xff]
    %v62 = vlaneseq
    %v63 = vand.u32 %v62, 127
    %vm64 = vcmp.lt.s32.totalorder %v63, 8
    %v65 = vsub.s32 %v63, 8
    %v66 = vsel %vm64, %v63, %v65
    %v67 = vsub.s32 %v66, 3
    %v68 = vcvt.s32.f32 %v67
    %vm69 = vcmp.eq.f32.partialorder %v61, %v68
    %v70 = vsel %vm69, 1, 0
    %v71 = vcvt.s32.f32 %v70
    %vm72 = vcmp.lt.s32.totalorder %v66, 3
    %v73 = vsel %vm72, %v61, %v71
    %v74 = vpack.c.bf16 %v73, %v73
    %v75 = vld [vmem:[#allocation5] sm:$0xff]
    %v76 = vld [vmem:[#allocation5 + $0x8] sm:$0xff]
    %v77 = vld [vmem:[%s2] sm:$0x3]
    %v79 = vlaneseq
    %v80 = vshrl.u32 %v79, 7
    %v81 = vsub.s32 0, %v80
    %v82 = vrot.slane %v77, %v81
    %v83 = vlaneseq
    %v84 = vshrl.u32 %v83, 7
    %v85 = vsub.s32 1, %v84
    %v86 = vrot.slane %v77, %v85
    %v91 = vunpack.c.l.b16 %v75
    %v92 = vunpack.c.h.b16 %v75
    %v93 = vunpack.c.l.b16 %v76
    %v94 = vunpack.c.h.b16 %v76
    %v95 = vpack.c.b16 %v93, %v91
    %v96 = vpack.c.b16 %v94, %v92
    %vm99 = vcmask 130048
    %v101 = vsel %vm99, %v74, 0
    %103 = vmatprep.subr.bf16.mxu0 %v96
    %104 = vmatpush1.bf16.msra.mxu0 %v95
    %105 = vmatprep.subr.bf16.mxu0 0
    %106 = vmatpush1.bf16.msra.mxu0 0
    %107 = vmatprep.subr.bf16.mxu0 0
    %108 = vmatpush1.bf16.msra.mxu0 0
    %109 = vmatprep.subr.bf16.mxu0 0
    %110 = vmatpush1.bf16.msra.mxu0 0
    %111 = vmatprep.subr.bf16.mxu0 0
    %112 = vmatpush1.bf16.msra.mxu0 0
    %113 = vmatprep.subr.bf16.mxu0 0
    %114 = vmatpush1.bf16.msra.mxu0 0
    %115 = vmatprep.subr.bf16.mxu0 0
    %116 = vmatpush1.bf16.msra.mxu0 0
    %117 = vmatprep.subr.bf16.mxu0 0
    %118 = vmatpush1.bf16.msra.mxu0 0
    %119 = vmatprep.subr.bf16.mxu0 0
    %120 = vmatpush1.bf16.msra.mxu0 0
    %121 = vmatprep.subr.bf16.mxu0 0
    %122 = vmatpush1.bf16.msra.mxu0 0
    %123 = vmatprep.subr.bf16.mxu0 0
    %124 = vmatpush1.bf16.msra.mxu0 0
    %125 = vmatprep.subr.bf16.mxu0 0
    %126 = vmatpush1.bf16.msra.mxu0 0
    %127 = vmatprep.subr.bf16.mxu0 0
    %128 = vmatpush1.bf16.msra.mxu0 0
    %129 = vmatprep.subr.bf16.mxu0 0
    %130 = vmatpush1.bf16.msra.mxu0 0
    %131 = vmatprep.subr.bf16.mxu0 0
    %132 = vmatpush1.bf16.msra.mxu0 0
    %133 = vmatprep.subr.bf16.mxu0 0
    %134 = vmatpush1.bf16.msra.mxu0 0
    %135 = vmatprep.mubr.bf16.mxu0 0
    %136 = vmatmul.mubr.bf16.gmra.mrb[0].mxu0 %v101
    %v137 = vpop.f32.mrb[0].mxu0
    %v138 = vadd.f32 %v82, %v137
    %v139 = vpop.f32.mrb[0].mxu0
    %v140 = vadd.f32 %v86, %v139
    %v141 = vpop.f32.mrb[0].mxu0
    %v142 = vpop.f32.mrb[0].mxu0
    %143 = vdwg.mxu0
    %v144 = vmax.f32 %v138, 0.0
    %v145 = vmax.f32 %v140, 0.0
    %v146 = vpack.c.bf16 %v144, %v144
    %v147 = vpack.c.bf16 %v145, %v145
    %v148 = vld [vmem:[#allocation7] sm:$0xf]
    %v149 = vld [vmem:[#allocation7 + $0x4] sm:$0xf]
    %v150 = vld [vmem:[#allocation7 + $0x8] sm:$0xf]
    %v151 = vld [vmem:[#allocation7 + $0xc] sm:$0xf]
    %v152 = vld [vmem:[#allocation7 + $0x10] sm:$0xf]
    %v153 = vld [vmem:[#allocation7 + $0x14] sm:$0xf]
    %v154 = vld [vmem:[#allocation7 + $0x18] sm:$0xf]
    %v155 = vld [vmem:[#allocation7 + $0x1c] sm:$0xf]
    %v156 = vld [vmem:[#allocation7 + $0x20] sm:$0xf]
    %v157 = vld [vmem:[#allocation7 + $0x24] sm:$0xf]
    %v158 = vld [vmem:[#allocation7 + $0x28] sm:$0xf]
    %v159 = vld [vmem:[#allocation7 + $0x2c] sm:$0xf]
    %v160 = vld [vmem:[#allocation7 + $0x30] sm:$0xf]
    %v161 = vld [vmem:[#allocation7 + $0x34] sm:$0xf]
    %v162 = vld [vmem:[#allocation7 + $0x38] sm:$0xf]
    %v163 = vld [vmem:[#allocation7 + $0x3c] sm:$0xf]
    %v164 = vld [vmem:[#allocation7 + $0x40] sm:$0xf]
    %v165 = vld [vmem:[#allocation7 + $0x44] sm:$0xf]
    %v166 = vld [vmem:[#allocation7 + $0x48] sm:$0xf]
    %v167 = vld [vmem:[#allocation7 + $0x4c] sm:$0xf]
    %v168 = vld [vmem:[#allocation7 + $0x50] sm:$0xf]
    %v169 = vld [vmem:[#allocation7 + $0x54] sm:$0xf]
    %v170 = vld [vmem:[#allocation7 + $0x58] sm:$0xf]
    %v171 = vld [vmem:[#allocation7 + $0x5c] sm:$0xf]
    %v172 = vld [vmem:[#allocation7 + $0x60] sm:$0xf]
    %v173 = vld [vmem:[#allocation7 + $0x64] sm:$0xf]
    %v174 = vld [vmem:[#allocation7 + $0x68] sm:$0xf]
    %v175 = vld [vmem:[#allocation7 + $0x6c] sm:$0xf]
    %v176 = vld [vmem:[#allocation7 + $0x70] sm:$0xf]
    %v177 = vld [vmem:[#allocation7 + $0x74] sm:$0xf]
    %v178 = vld [vmem:[#allocation7 + $0x78] sm:$0xf]
    %v179 = vld [vmem:[#allocation7 + $0x7c] sm:$0xf]
    %v180 = vld [vmem:[%s4] sm:$0x1]
    %v182 = vlaneseq
    %v183 = vshrl.u32 %v182, 7
    %v184 = vsub.s32 0, %v183
    %v185 = vrot.slane %v180, %v184
    %v219 = vunpack.c.l.b16 %v148
    %v220 = vunpack.c.l.b16 %v149
    %v221 = vunpack.c.l.b16 %v150
    %v222 = vunpack.c.l.b16 %v151
    %v223 = vunpack.c.l.b16 %v152
    %v224 = vunpack.c.l.b16 %v153
    %v225 = vunpack.c.l.b16 %v154
    %v226 = vunpack.c.l.b16 %v155
    %v227 = vunpack.c.l.b16 %v156
    %v228 = vunpack.c.l.b16 %v157
    %v229 = vunpack.c.l.b16 %v158
    %v230 = vunpack.c.l.b16 %v159
    %v231 = vunpack.c.l.b16 %v160
    %v232 = vunpack.c.l.b16 %v161
    %v233 = vunpack.c.l.b16 %v162
    %v234 = vunpack.c.l.b16 %v163
    %v235 = vunpack.c.l.b16 %v164
    %v236 = vunpack.c.l.b16 %v165
    %v237 = vunpack.c.l.b16 %v166
    %v238 = vunpack.c.l.b16 %v167
    %v239 = vunpack.c.l.b16 %v168
    %v240 = vunpack.c.l.b16 %v169
    %v241 = vunpack.c.l.b16 %v170
    %v242 = vunpack.c.l.b16 %v171
    %v243 = vunpack.c.l.b16 %v172
    %v244 = vunpack.c.l.b16 %v173
    %v245 = vunpack.c.l.b16 %v174
    %v246 = vunpack.c.l.b16 %v175
    %v247 = vunpack.c.l.b16 %v176
    %v248 = vunpack.c.l.b16 %v177
    %v249 = vunpack.c.l.b16 %v178
    %v250 = vunpack.c.l.b16 %v179
    %v251 = vpack.c.b16 %v220, %v219
    %v252 = vpack.c.b16 %v222, %v221
    %v253 = vpack.c.b16 %v224, %v223
    %v254 = vpack.c.b16 %v226, %v225
    %v255 = vpack.c.b16 %v228, %v227
    %v256 = vpack.c.b16 %v230, %v229
    %v257 = vpack.c.b16 %v232, %v231
    %v258 = vpack.c.b16 %v234, %v233
    %v259 = vpack.c.b16 %v236, %v235
    %v260 = vpack.c.b16 %v238, %v237
    %v261 = vpack.c.b16 %v240, %v239
    %v262 = vpack.c.b16 %v242, %v241
    %v263 = vpack.c.b16 %v244, %v243
    %v264 = vpack.c.b16 %v246, %v245
    %v265 = vpack.c.b16 %v248, %v247
    %v266 = vpack.c.b16 %v250, %v249
    %283 = vmatprep.subr.bf16.mxu0 0
    %284 = vmatpush1.bf16.msra.mxu0 %v251
    %285 = vmatprep.subr.bf16.mxu0 0
    %286 = vmatpush1.bf16.msra.mxu0 %v252
    %287 = vmatprep.subr.bf16.mxu0 0
    %288 = vmatpush1.bf16.msra.mxu0 %v253
    %289 = vmatprep.subr.bf16.mxu0 0
    %290 = vmatpush1.bf16.msra.mxu0 %v254
    %291 = vmatprep.subr.bf16.mxu0 0
    %292 = vmatpush1.bf16.msra.mxu0 %v255
    %293 = vmatprep.subr.bf16.mxu0 0
    %294 = vmatpush1.bf16.msra.mxu0 %v256
    %295 = vmatprep.subr.bf16.mxu0 0
    %296 = vmatpush1.bf16.msra.mxu0 %v257
    %297 = vmatprep.subr.bf16.mxu0 0
    %298 = vmatpush1.bf16.msra.mxu0 %v258
    %299 = vmatprep.subr.bf16.mxu0 0
    %300 = vmatpush1.bf16.msra.mxu0 %v259
    %301 = vmatprep.subr.bf16.mxu0 0
    %302 = vmatpush1.bf16.msra.mxu0 %v260
    %303 = vmatprep.subr.bf16.mxu0 0
    %304 = vmatpush1.bf16.msra.mxu0 %v261
    %305 = vmatprep.subr.bf16.mxu0 0
    %306 = vmatpush1.bf16.msra.mxu0 %v262
    %307 = vmatprep.subr.bf16.mxu0 0
    %308 = vmatpush1.bf16.msra.mxu0 %v263
    %309 = vmatprep.subr.bf16.mxu0 0
    %310 = vmatpush1.bf16.msra.mxu0 %v264
    %311 = vmatprep.subr.bf16.mxu0 0
    %312 = vmatpush1.bf16.msra.mxu0 %v265
    %313 = vmatprep.subr.bf16.mxu0 0
    %314 = vmatpush1.bf16.msra.mxu0 %v266
    %315 = vmatprep.mubr.bf16.mxu0 %v147
    %316 = vmatmul.mubr.bf16.gmra.mrb[0].mxu0 %v146
    %v317 = vpop.f32.mrb[0].mxu0
    %v318 = vadd.f32 %v185, %v317
    %v319 = vpop.f32.mrb[0].mxu0
    %v320 = vpop.f32.mrb[0].mxu0
    %v321 = vpop.f32.mrb[0].mxu0
    %322 = vdwg.mxu0
    %v323 = vmax.f32 %v318, 0.0
    %324 = vst [vmem:[#allocation8] sm:$0xff] %v323
    // Predicated region
    $region34: #{tpu_custom_call.1} parent=1 // pred_check
      _
    $region35: #{tpu_custom_call.1} parent=1 // pred_check_branch
      %326 = sbr.rel (0) target = $region37
    $region36: #{tpu_custom_call.1} parent=1 // pred_region
      %s328 = ssub.s32 128, 128
      %329 = vsyncadd [#allocation4], %s328
      %s331 = sshll.u32 [#allocation8], 4
      %s332 = int_to_ptr.vmem [resolvable:$true] %s331
      %334 = dma.vmem_to_hbm [thread:$0]  %s332, 128, %s5, [#allocation4]
    $region37: #{tpu_custom_call.1} parent=1 // pred_fallthru
      _
    // Predicated region
    $region38: #{tpu_custom_call.1} parent=1 // pred_check
      _
    $region39: #{tpu_custom_call.1} parent=1 // pred_check_branch
      %336 = sbr.rel (0) target = $region41
    $region40: #{tpu_custom_call.1} parent=1 // pred_region
      %337 = dma.done [#allocation4], 128
    $region41: #{tpu_custom_call.1} parent=1 // pred_fallthru
      _
    %338 = vsyncpa [#allocation3], 1
    %339 = vsyncpa [#allocation6], 1
    %340 = vsyncpa [#allocation4], 1

</llo_original>
